<compile_context>
chip_gen: v5e
topology: v5e:2x2
jax: 0.10.0
libtpu: 0.0.40
codegen_flags: <defaults>
</compile_context>

<pallas_src>
import jax
import jax.numpy as jnp
from jax.experimental import pallas as pl
from jax.experimental.pallas import tpu as pltpu


def gcn_kernel(x_ref, adj_ref, wt_ref, b_ref, o_ref):
    # x_ref:   (Bt, N, F_in)   compute_dtype
    # adj_ref: (Bt, N, N)      compute_dtype
    # wt_ref:  (F_in, F_out)   compute_dtype  (pre-transposed W)
    # b_ref:   (1, F_out)      float32
    # o_ref:   (Bt, N, F_out)  output dtype
    bt, n, f_in = x_ref.shape
    f_out = o_ref.shape[-1]

    x = x_ref[...]
    adj = adj_ref[...]

    # 1) Aggregate first on the narrow F_in-wide operand:
    #    agg[b] = adj[b] @ x[b], f32 accumulation on the MXU.
    agg = jnp.einsum("bnm,bmf->bnf", adj, x,
                     preferred_element_type=jnp.float32)

    # Exact bias handling under the reorder:
    #   adj @ (x W^T + 1 b^T) = (adj @ x) W^T + rowsum(adj) b^T
    rowsum = jnp.sum(adj.astype(jnp.float32), axis=-1, keepdims=True)  # (Bt,N,1)
    bias_term = rowsum * b_ref[...]                                    # (Bt,N,F_out) f32

    # Back to the compute dtype so the projection runs at bf16 MXU rate on
    # the fast path (no-op when compute_dtype is f32).
    agg = agg.astype(x.dtype)

    # 2) Project last, feeding the output store directly.
    sublane_pack = 8 if agg.dtype == jnp.float32 else 16
    if n % sublane_pack == 0:
        # (bt, n) merge is a free reinterpretation -> one big
        # (Bt*N, F_in) @ (F_in, F_out) MXU matmul (batch-folded M-dim).
        proj = jnp.dot(agg.reshape(bt * n, f_in), wt_ref[...],
                       preferred_element_type=jnp.float32)
        out = proj.reshape(bt, n, f_out) + bias_term
    else:
        # Avoid a relayout copy when the merge would cross a sublane tile.
        proj = jnp.einsum("bnf,fo->bno", agg, wt_ref[...],
                          preferred_element_type=jnp.float32)
        out = proj + bias_term

    o_ref[...] = out.astype(o_ref.dtype)


def _tpu_vmem_and_min_steps():
    """(per-core VMEM capacity bytes, minimum desired grid steps)."""
    vmem_cap = 64 << 20  # conservative default = v7x per-TensorCore
    try:
        vmem_cap = int(pltpu.get_tpu_info().vmem_capacity_bytes)
    except Exception:
        pass
    # v7x-like parts (64 MiB / TC, 2 TCs per chip): want >= 4 grid steps so
    # megacore sharding gives each core >= 2 pipelined steps.  Single-core
    # v5e/v6e (128 MiB): >= 2 steps is enough for prefetch overlap.
    min_steps = 4 if vmem_cap <= (64 << 20) else 2
    return vmem_cap, min_steps


def _choose_block_b(B, per_batch_io, per_batch_tmp, const_bytes,
                    vmem_cap, min_steps):
    """How many batch elements to fold into one grid step."""
    # Budget: double-buffered I/O blocks + single copy of the f32 temps,
    # within ~half of VMEM (rest is headroom for compiler scratch/regalloc).
    budget = vmem_cap // 2 - const_bytes
    denom = 2 * per_batch_io + per_batch_tmp
    cap = max(1, budget // max(1, denom))
    # Keep >= min_steps grid steps; otherwise fold the largest block that
    # fits (mem-bound kernel: fewer, larger blocks approach the HBM roofline
    # and amortize the ~0.35 us/step pipeline overhead).
    steps = max(1, min(B, min_steps))
    bt = max(1, min(cap, B // steps, B))
    # Round down to a divisor of B so the grid tiles exactly.
    while B % bt:
        bt -= 1
    return int(bt)


def gcn_layer(x, adj, weight, bias, *, compute_dtype=jnp.bfloat16, block_b=None):
    """output = adj @ (x @ weight.T + bias), fused in one Pallas kernel.

    x:      (B, N, F_in)
    adj:    (B, N, N)
    weight: (F_out, F_in)   (torch nn.Linear convention)
    bias:   (F_out,)
    """
    B, N, F_in = x.shape
    F_out = weight.shape[0]
    out_dtype = x.dtype

    # Host-side layout plumbing: pre-transpose W, 2-D bias, cast MXU inputs.
    wt = weight.T.astype(compute_dtype)                       # (F_in, F_out)
    b2 = bias.reshape(1, F_out).astype(jnp.float32)           # (1, F_out)
    xc = x.astype(compute_dtype)
    adjc = adj.astype(compute_dtype)

    c_item = jnp.dtype(compute_dtype).itemsize
    o_item = jnp.dtype(out_dtype).itemsize

    # Per-batch-element VMEM: streamed I/O blocks and f32 in-kernel temps
    # (agg f32 + agg cast + proj f32 + rowsum).
    per_batch_io = N * F_in * c_item + N * N * c_item + N * F_out * o_item
    per_batch_tmp = N * (F_in * (4 + c_item) + F_out * 4 + 8)
    const_bytes = 2 * (F_in * F_out * c_item + F_out * 4)     # double-buffered

    vmem_cap, min_steps = _tpu_vmem_and_min_steps()

    if block_b is None:
        block_b = _choose_block_b(B, per_batch_io, per_batch_tmp, const_bytes,
                                  vmem_cap, min_steps)
    if B % block_b:
        raise ValueError(
            f"block_b={block_b} must divide batch size B={B}; otherwise the "
            f"trailing batch elements would be left unwritten.")
    grid_b = B // block_b

    needed = (2 * block_b * per_batch_io + block_b * per_batch_tmp
              + const_bytes + (2 << 20))
    # Cap at 5/8 of capacity: ~40 MiB on v7x, ~80 MiB on v5e/v6e.
    vmem_limit = int(min(max(needed, 16 << 20), (vmem_cap * 5) // 8))

    out = pl.pallas_call(
        gcn_kernel,
        out_shape=jax.ShapeDtypeStruct((B, N, F_out), out_dtype),
        grid_spec=pltpu.PrefetchScalarGridSpec(
            num_scalar_prefetch=0,
            grid=(grid_b,),
            in_specs=[
                pl.BlockSpec((block_b, N, F_in), lambda i: (i, 0, 0)),
                pl.BlockSpec((block_b, N, N), lambda i: (i, 0, 0)),
                pl.BlockSpec((F_in, F_out), lambda i: (0, 0)),
                pl.BlockSpec((1, F_out), lambda i: (0, 0)),
            ],
            out_specs=pl.BlockSpec((block_b, N, F_out), lambda i: (i, 0, 0)),
        ),
        compiler_params=pltpu.CompilerParams(
            dimension_semantics=("parallel",),
            vmem_limit_bytes=vmem_limit,
        ),
    )(xc, adjc, wt, b2)

    return out


def gcn_layer_ref(x, adj, weight, bias):
    # Pure-JAX f32 reference matching torch semantics / op order.
    support = jnp.einsum("bnf,of->bno", x, weight) + bias
    return jnp.einsum("bnm,bmo->bno", adj, support)


def gcn_layer_ref_cast(x, adj, weight, bias, compute_dtype):
    # Reference applying the same casts and op order as the fast kernel path.
    xc = x.astype(compute_dtype)
    adjc = adj.astype(compute_dtype)
    agg = jnp.einsum("bnm,bmf->bnf", adjc, xc,
                     preferred_element_type=jnp.float32)
    rowsum = jnp.sum(adjc.astype(jnp.float32), axis=-1, keepdims=True)
    agg = agg.astype(compute_dtype)
    proj = jnp.einsum("bnf,fo->bno", agg, weight.T.astype(compute_dtype),
                      preferred_element_type=jnp.float32)
    return proj + rowsum * bias.astype(jnp.float32)


if __name__ == "__main__":
    key = jax.random.PRNGKey(0)
    k_x, k_adj, k_w, k_b = jax.random.split(key, 4)

    B, N, F_in, F_out = 8, 16, 32, 32

    x = jax.random.normal(k_x, (B, N, F_in), dtype=jnp.float32)
    adj = jax.random.uniform(k_adj, (B, N, N), dtype=jnp.float32)

    # Deterministic nn.Linear-style init: U(-1/sqrt(in), 1/sqrt(in))
    bound = 1.0 / jnp.sqrt(jnp.float32(F_in))
    weight = jax.random.uniform(
        k_w, (F_out, F_in), dtype=jnp.float32, minval=-bound, maxval=bound)
    bias = jax.random.uniform(
        k_b, (F_out,), dtype=jnp.float32, minval=-bound, maxval=bound)

    # Exact path (f32 end-to-end): matches the torch-equivalent reference
    # (reorder is algebraically exact; only summation order differs).
    out_f32 = jax.block_until_ready(
        gcn_layer(x, adj, weight, bias, compute_dtype=jnp.float32))
    ref_f32 = gcn_layer_ref(x, adj, weight, bias)
    assert out_f32.shape == (B, N, F_out)
    assert jnp.allclose(out_f32, ref_f32, atol=1e-4, rtol=1e-4), "f32 mismatch"

    # Fast path (default): bf16 MXU inputs, f32 accumulation, f32 bias/rowsum.
    out_bf16 = jax.block_until_ready(gcn_layer(x, adj, weight, bias))
    ref_bf16 = gcn_layer_ref_cast(x, adj, weight, bias, jnp.bfloat16)
    assert out_bf16.shape == (B, N, F_out)
    assert jnp.allclose(out_bf16, ref_bf16, atol=2e-2, rtol=2e-2), \
        "bf16 mismatch vs matched-precision reference"
    assert jnp.allclose(out_bf16, ref_f32, atol=0.3, rtol=0.1), \
        "bf16 result far from f32 reference"

    print("KERNEL_OK")
</pallas_src>

<mosaic_0001>
module attributes {stable_mosaic.version = 11 : i64} {
  func.func @gcn_kernel(%arg0: i32, %arg1: memref<2x16x32xf32, #tpu.memory_space<vmem>>, %arg2: memref<2x16x16xf32, #tpu.memory_space<vmem>>, %arg3: memref<32x32xf32, #tpu.memory_space<vmem>>, %arg4: memref<1x32xf32, #tpu.memory_space<vmem>>, %arg5: memref<2x16x32xf32, #tpu.memory_space<vmem>>) attributes {dimension_semantics = [#tpu.dimension_semantics<parallel>], iteration_bounds = array<i64: 4>, scalar_prefetch = 0 : i64, scratch_operands = 0 : i64, tpu.core_type = #tpu.core_type<tc>, window_params = [{transform_indices = @transform_0, window_bounds = array<i64: 2, 16, 32>}, {transform_indices = @transform_1, window_bounds = array<i64: 2, 16, 16>}, {pipeline_mode = #tpu.pipeline_mode<synchronous>, transform_indices = @transform_2, window_bounds = array<i64: 32, 32>}, {pipeline_mode = #tpu.pipeline_mode<synchronous>, transform_indices = @transform_3, window_bounds = array<i64: 1, 32>}, {transform_indices = @transform_4, window_bounds = array<i64: 2, 16, 32>}]} {
    %c0 = arith.constant 0 : index
    %c0_0 = arith.constant 0 : index
    %c0_1 = arith.constant 0 : index
    %0 = vector.load %arg1[%c0, %c0_0, %c0_1] : memref<2x16x32xf32, #tpu.memory_space<vmem>>, vector<2x16x32xf32>
    %c0_2 = arith.constant 0 : index
    %c0_3 = arith.constant 0 : index
    %c0_4 = arith.constant 0 : index
    %1 = vector.load %arg2[%c0_2, %c0_3, %c0_4] : memref<2x16x16xf32, #tpu.memory_space<vmem>>, vector<2x16x16xf32>
    "tpu.trace_start"() <{level = 10 : i32, message = "bnm,bmf->bnf"}> : () -> ()
    %cst = arith.constant dense<0.000000e+00> : vector<2x16x32xf32>
    %2 = tpu.matmul %1, %0, %cst {dimension_numbers = #tpu.dot_dimension_numbers<[2], [1], [1], [2], [0, 0, 0, 1, 1, 2], [0], [0]>} : vector<2x16x16xf32>, vector<2x16x32xf32>, vector<2x16x32xf32> -> vector<2x16x32xf32>
    "tpu.trace_stop"() : () -> ()
    %cst_5 = arith.constant dense<0.000000e+00> : vector<2x16xf32>
    %3 = vector.multi_reduction <add>, %1, %cst_5 [2] : vector<2x16x16xf32> to vector<2x16xf32>
    %4 = vector.shape_cast %3 : vector<2x16xf32> to vector<2x16x1xf32>
    %c0_6 = arith.constant 0 : index
    %c0_7 = arith.constant 0 : index
    %5 = vector.load %arg4[%c0_6, %c0_7] : memref<1x32xf32, #tpu.memory_space<vmem>>, vector<1x32xf32>
    %6 = vector.shape_cast %5 : vector<1x32xf32> to vector<1x1x32xf32>
    %7 = vector.broadcast %4 : vector<2x16x1xf32> to vector<2x16x32xf32>
    %8 = vector.broadcast %6 : vector<1x1x32xf32> to vector<2x16x32xf32>
    %9 = arith.mulf %7, %8 : vector<2x16x32xf32>
    %10 = vector.shape_cast %2 : vector<2x16x32xf32> to vector<32x32xf32>
    %c0_8 = arith.constant 0 : index
    %c0_9 = arith.constant 0 : index
    %11 = vector.load %arg3[%c0_8, %c0_9] : memref<32x32xf32, #tpu.memory_space<vmem>>, vector<32x32xf32>
    %cst_10 = arith.constant dense<0.000000e+00> : vector<32x32xf32>
    %12 = tpu.matmul %10, %11, %cst_10 {dimension_numbers = #tpu.dot_dimension_numbers<[1], [0], [0], [1], [0, 0, 1, 1], [], []>} : vector<32x32xf32>, vector<32x32xf32>, vector<32x32xf32> -> vector<32x32xf32>
    %13 = vector.shape_cast %12 : vector<32x32xf32> to vector<2x16x32xf32>
    %14 = arith.addf %13, %9 : vector<2x16x32xf32>
    %c0_11 = arith.constant 0 : index
    %c0_12 = arith.constant 0 : index
    %c0_13 = arith.constant 0 : index
    %15 = vector.load %arg5[%c0_11, %c0_12, %c0_13] : memref<2x16x32xf32, #tpu.memory_space<vmem>>, vector<2x16x32xf32>
    tpu.vector_store %arg5[%c0_11, %c0_12, %c0_13], %14 {strides = array<i32>} : memref<2x16x32xf32, #tpu.memory_space<vmem>>, vector<2x16x32xf32>,
    return
  }
  func.func @transform_0(%arg0: i32) -> (i32, i32, i32) {
    %c0_i32 = arith.constant 0 : i32
    %c0_i32_0 = arith.constant 0 : i32
    %c0_i32_1 = arith.constant 0 : i32
    return %arg0, %c0_i32, %c0_i32_0 : i32, i32, i32
  }
  func.func @transform_1(%arg0: i32) -> (i32, i32, i32) {
    %c0_i32 = arith.constant 0 : i32
    %c0_i32_0 = arith.constant 0 : i32
    %c0_i32_1 = arith.constant 0 : i32
    return %arg0, %c0_i32, %c0_i32_0 : i32, i32, i32
  }
  func.func @transform_2(%arg0: i32) -> (i32, i32) {
    %c0_i32 = arith.constant 0 : i32
    %c0_i32_0 = arith.constant 0 : i32
    %c0_i32_1 = arith.constant 0 : i32
    return %c0_i32, %c0_i32_0 : i32, i32
  }
  func.func @transform_3(%arg0: i32) -> (i32, i32) {
    %c0_i32 = arith.constant 0 : i32
    %c0_i32_0 = arith.constant 0 : i32
    %c0_i32_1 = arith.constant 0 : i32
    return %c0_i32, %c0_i32_0 : i32, i32
  }
  func.func @transform_4(%arg0: i32) -> (i32, i32, i32) {
    %c0_i32 = arith.constant 0 : i32
    %c0_i32_0 = arith.constant 0 : i32
    %c0_i32_1 = arith.constant 0 : i32
    return %arg0, %c0_i32, %c0_i32_0 : i32, i32, i32
  }
}

</mosaic_0001>

<llo_original>
// kernel: tpu_custom_call.1
$region0: #{tpu_custom_call.1}
  #allocation0 [shape = 'u32[]', space=smem, size = 0x4, offset = 0x4, fixed_abs, tag = 'smem constant byte address 0x4 - core index']
  #allocation1 [shape = 'u32[72,128]{1,0:T(1,128)}', space=vmem, size = 0x9000, scoped, tag = 'internal scratch']
  %s0 = inlined_call_operand.hbm [shape: f32[8,16,32], index: 0, kind: input, shape index: {}]
  %s1 = inlined_call_operand.hbm [shape: f32[8,16,16], index: 1, kind: input, shape index: {}]
  %s2 = inlined_call_operand.hbm [shape: f32[32,32], index: 2, kind: input, shape index: {}]
  %s3 = inlined_call_operand.vmem [shape: f32[1,32], index: 3, kind: input, shape index: {}]
  %s4 = inlined_call_operand.hbm [shape: f32[8,16,32], index: 4, kind: output, shape index: {}]
  %s5 = sld [smem:[#allocation0]]
  $region61: #{tpu_custom_call.1} parent=0
    _
  %s7 = ssub.s32 1, %s5
  %s8 = scalar_select 0, %s7, %s5
  $region1: #{tpu_custom_call.1} parent=0
    #allocation2 [shape = 'u8[32768]{0}', space=vmem, size = 0x8000, scoped, tag = 'input window, operand 0']
    #allocation3 [shape = 's32[2]{0}', space=sflag, size = 0x8, scoped, tag = 'scoped memory for tpu_custom_call.1']
    #allocation4 [shape = 's32[2]{0}', space=sflag, size = 0x8, scoped, tag = 'scoped memory for tpu_custom_call.1']
    #allocation5 [shape = 'u8[32768]{0}', space=vmem, size = 0x8000, scoped, tag = 'input window, operand 1']
    #allocation6 [shape = 's32[2]{0}', space=sflag, size = 0x8, scoped, tag = 'scoped memory for tpu_custom_call.1']
    #allocation7 [shape = 'u8[16384]{0}', space=vmem, size = 0x4000, scoped, tag = 'input window, operand 2, single buffered']
    #allocation8 [shape = 'u8[32768]{0}', space=vmem, size = 0x8000, scoped, tag = 'output window, operand 0']
    %9 = vsyncpa [#allocation3], 0
    %s10 = scalar_lea.sflag [#allocation3], 1
    %11 = vsyncpa %s10, 0
    %12 = vsyncpa [#allocation6], 0
    %s13 = scalar_lea.sflag [#allocation6], 1
    %14 = vsyncpa %s13, 0
    %15 = vsyncpa [#allocation4], 0
    %s16 = scalar_lea.sflag [#allocation4], 1
    %17 = vsyncpa %s16, 0
    loop: start=0, step=1, limit=6
    $region2: #{tpu_custom_call.1} parent=1 // loop_pre_header
      _
    $region3: #{tpu_custom_call.1} parent=1 // loop_header
      %s19 = sphi 0, %s23
      %p20 = scmp.ge.s32.totalorder %s19, 6
      %s29 = sphi 0, %s31
      %s32 = sphi 0, %s29
      %s33 = sphi 0, %s32
      %s49 = sphi 0, %s33
      %s55 = sphi 0, %s57
      %s58 = sphi 0, %s55
      %s59 = sphi 0, %s58
      %s75 = sphi 0, %s59
      %s79 = sphi 0, %s79
      %s81 = sphi 0, %s79
      %s82 = sphi 0, %s81
      %s96 = sphi 0, %s82
      %s100 = sphi 0, %s100
      %s102 = sphi 0, %s100
      %s103 = sphi 0, %s102
      %s117 = sphi 0, %s103
      %s123 = sphi 0, %s125
      %s126 = sphi 0, %s123
      %s127 = sphi 0, %s126
      %s143 = sphi 0, %s127
    $region4: #{tpu_custom_call.1} parent=1 // loop_header_branch
      %22 = sbr.rel (%p20) target = $region8
    $region5: #{tpu_custom_call.1} parent=1 // loop_body
      %s24 = ssub.s32 %s19, 1
      %s25 = ssub.s32 %s19, 2
      %s26 = sadd.s32 %s19, 1
      %s27 = ssub.s32 %s19, %s26
      %p28 = scmp.eq.s32.totalorder %s27, 0
      %s30 = sadd.s32 %s29, 1
      %s31 = scalar_select %p28, %s29, %s30
      %p34 = pneg %p28
      %p35 = scmp.eq.s32.totalorder %s19, 3
      %p36 = por %p34, %p35
      %p37 = scmp.ne.s32.totalorder %s29, %s32
      %p38 = scmp.eq.s32.totalorder %s19, 0
      %p39 = por %p37, %p38
      %p40 = scmp.ne.s32.totalorder %s29, %s32
      %p41 = scmp.eq.s32.totalorder %s24, 3
      %p42 = por %p40, %p41
      %p43 = scmp.ne.s32.totalorder %s32, %s33
      %p44 = scmp.eq.s32.totalorder %s24, 0
      %p45 = por %p43, %p44
      %p46 = scmp.ne.s32.totalorder %s32, %s33
      %p47 = scmp.eq.s32.totalorder %s25, 3
      %p48 = por %p46, %p47
      %p50 = scmp.ne.s32.totalorder %s33, %s49
      %p51 = scmp.eq.s32.totalorder %s25, 0
      %p52 = por %p50, %p51
      %s53 = ssub.s32 %s19, %s26
      %p54 = scmp.eq.s32.totalorder %s53, 0
      %s56 = sadd.s32 %s55, 1
      %s57 = scalar_select %p54, %s55, %s56
      %p60 = pneg %p54
      %p61 = scmp.eq.s32.totalorder %s19, 3
      %p62 = por %p60, %p61
      %p63 = scmp.ne.s32.totalorder %s55, %s58
      %p64 = scmp.eq.s32.totalorder %s19, 0
      %p65 = por %p63, %p64
      %p66 = scmp.ne.s32.totalorder %s55, %s58
      %p67 = scmp.eq.s32.totalorder %s24, 3
      %p68 = por %p66, %p67
      %p69 = scmp.ne.s32.totalorder %s58, %s59
      %p70 = scmp.eq.s32.totalorder %s24, 0
      %p71 = por %p69, %p70
      %p72 = scmp.ne.s32.totalorder %s58, %s59
      %p73 = scmp.eq.s32.totalorder %s25, 3
      %p74 = por %p72, %p73
      %p76 = scmp.ne.s32.totalorder %s59, %s75
      %p77 = scmp.eq.s32.totalorder %s25, 0
      %p78 = por %p76, %p77
      %s80 = sadd.s32 %s79, 1
      %p83 = scmp.eq.s32.totalorder %s19, 3
      %p84 = scmp.ne.s32.totalorder %s79, %s81
      %p85 = scmp.eq.s32.totalorder %s19, 0
      %p86 = por %p84, %p85
      %p87 = scmp.ne.s32.totalorder %s79, %s81
      %p88 = scmp.eq.s32.totalorder %s24, 3
      %p89 = por %p87, %p88
      %p90 = scmp.ne.s32.totalorder %s81, %s82
      %p91 = scmp.eq.s32.totalorder %s24, 0
      %p92 = por %p90, %p91
      %p93 = scmp.ne.s32.totalorder %s81, %s82
      %p94 = scmp.eq.s32.totalorder %s25, 3
      %p95 = por %p93, %p94
      %p97 = scmp.ne.s32.totalorder %s82, %s96
      %p98 = scmp.eq.s32.totalorder %s25, 0
      %p99 = por %p97, %p98
      %s101 = sadd.s32 %s100, 1
      %p104 = scmp.eq.s32.totalorder %s19, 3
      %p105 = scmp.ne.s32.totalorder %s100, %s102
      %p106 = scmp.eq.s32.totalorder %s19, 0
      %p107 = por %p105, %p106
      %p108 = scmp.ne.s32.totalorder %s100, %s102
      %p109 = scmp.eq.s32.totalorder %s24, 3
      %p110 = por %p108, %p109
      %p111 = scmp.ne.s32.totalorder %s102, %s103
      %p112 = scmp.eq.s32.totalorder %s24, 0
      %p113 = por %p111, %p112
      %p114 = scmp.ne.s32.totalorder %s102, %s103
      %p115 = scmp.eq.s32.totalorder %s25, 3
      %p116 = por %p114, %p115
      %p118 = scmp.ne.s32.totalorder %s103, %s117
      %p119 = scmp.eq.s32.totalorder %s25, 0
      %p120 = por %p118, %p119
      %s121 = ssub.s32 %s19, %s26
      %p122 = scmp.eq.s32.totalorder %s121, 0
      %s124 = sadd.s32 %s123, 1
      %s125 = scalar_select %p122, %s123, %s124
      %p128 = pneg %p122
      %p129 = scmp.eq.s32.totalorder %s19, 3
      %p130 = por %p128, %p129
      %p131 = scmp.ne.s32.totalorder %s123, %s126
      %p132 = scmp.eq.s32.totalorder %s19, 0
      %p133 = por %p131, %p132
      %p134 = scmp.ne.s32.totalorder %s123, %s126
      %p135 = scmp.eq.s32.totalorder %s24, 3
      %p136 = por %p134, %p135
      %p137 = scmp.ne.s32.totalorder %s126, %s127
      %p138 = scmp.eq.s32.totalorder %s24, 0
      %p139 = por %p137, %p138
      %p140 = scmp.ne.s32.totalorder %s126, %s127
      %p141 = scmp.eq.s32.totalorder %s25, 3
      %p142 = por %p140, %p141
      %p144 = scmp.ne.s32.totalorder %s127, %s143
      %p145 = scmp.eq.s32.totalorder %s25, 0
      %p146 = por %p144, %p145
      %p147 = scmp.le.s32.totalorder 1, %s19
      %p148 = scmp.lt.s32.totalorder %s19, 5
      %p149 = pnand %p147, %p148
      %p150 = pneg %p149
      // Predicated region
      $region9: #{tpu_custom_call.1} parent=5 // pred_check
        _
      $region10: #{tpu_custom_call.1} parent=5 // pred_check_branch
        %152 = sbr.rel (%p149) target = $region12
      $region11: #{tpu_custom_call.1} parent=5 // pred_region
        %s153 = ssub.s32 %s19, 1
        // Predicated region
        $region13: #{tpu_custom_call.1} parent=11 // pred_check
          %p154 = pneg %p92
        $region14: #{tpu_custom_call.1} parent=11 // pred_check_branch
          %156 = sbr.rel (%p154) target = $region16
        $region15: #{tpu_custom_call.1} parent=11 // pred_region
          %158 = vsyncadd [#allocation6], 0
          %s159 = sshll.u32 %s2, 4
          %s160 = int_to_ptr.hbm [resolvable:$true] %s159
          %s161 = sshll.u32 [#allocation7], 4
          %s162 = int_to_ptr.vmem [resolvable:$true] %s161
          %167 = dma.hbm_to_vmem [thread:$0]  %s160, 512, %s162, [#allocation6], 128, 128, 8
        $region16: #{tpu_custom_call.1} parent=11 // pred_fallthru
          _
        // Predicated region
        $region17: #{tpu_custom_call.1} parent=11 // pred_check
          %p168 = pneg %p113
        $region18: #{tpu_custom_call.1} parent=11 // pred_check_branch
          %170 = sbr.rel (%p168) target = $region20
        $region19: #{tpu_custom_call.1} parent=11 // pred_region
          _
        $region20: #{tpu_custom_call.1} parent=11 // pred_fallthru
          _
      $region12: #{tpu_custom_call.1} parent=5 // pred_fallthru
        _
      %p171 = scmp.lt.s32.totalorder %s19, 4
      // Predicated region
      $region21: #{tpu_custom_call.1} parent=5 // pred_check
        %p172 = pneg %p171
      $region22: #{tpu_custom_call.1} parent=5 // pred_check_branch
        %174 = sbr.rel (%p172) target = $region24
      $region23: #{tpu_custom_call.1} parent=5 // pred_region
        // Predicated region
        $region25: #{tpu_custom_call.1} parent=23 // pred_check
          %p175 = pneg %p39
        $region26: #{tpu_custom_call.1} parent=23 // pred_check_branch
          %177 = sbr.rel (%p175) target = $region28
        $region27: #{tpu_custom_call.1} parent=23 // pred_region
          %s178 = sand.u32 %s29, 1
          %s179 = scalar_lea.sflag [#allocation3], %s178
          %s180 = sand.u32 %s29, 1
          %s181 = smul.addr %s180, 32
          %s182 = scalar_lea.vmem [#allocation2], %s181
          %s183 = smul.u32 2, %s19
          %185 = vsyncadd %s179, 0
          %s186 = smul.addr %s183, 2
          %s187 = smul.addr %s186, 8
          %s188 = scalar_lea.hbm %s0, %s187
          %s189 = sshll.u32 %s188, 4
          %s190 = int_to_ptr.hbm [resolvable:$true] %s189
          %s191 = sshll.u32 %s182, 4
          %s192 = int_to_ptr.vmem [resolvable:$true] %s191
          %197 = dma.hbm_to_vmem [thread:$0]  %s190, 512, %s192, %s179, 128, 128, 8
        $region28: #{tpu_custom_call.1} parent=23 // pred_fallthru
          _
        // Predicated region
        $region29: #{tpu_custom_call.1} parent=23 // pred_check
          %p198 = pneg %p65
        $region30: #{tpu_custom_call.1} parent=23 // pred_check_branch
          %200 = sbr.rel (%p198) target = $region32
        $region31: #{tpu_custom_call.1} parent=23 // pred_region
          %s201 = sand.u32 %s19, 1
          %s202 = scalar_lea.sflag [#allocation6], %s201
          %s203 = sand.u32 %s55, 1
          %s204 = smul.addr %s203, 32
          %s205 = scalar_lea.vmem [#allocation5], %s204
          %s206 = smul.u32 2, %s19
          %208 = vsyncadd %s202, 0
          %s209 = smul.addr %s206, 2
          %s210 = smul.addr %s209, 8
          %s211 = scalar_lea.hbm %s1, %s210
          %s212 = sshll.u32 %s211, 4
          %s213 = int_to_ptr.hbm [resolvable:$true] %s212
          %s214 = sshll.u32 %s205, 4
          %s215 = int_to_ptr.vmem [resolvable:$true] %s214
          %220 = dma.hbm_to_vmem [thread:$0]  %s213, 512, %s215, %s202, 128, 128, 8
        $region32: #{tpu_custom_call.1} parent=23 // pred_fallthru
          _
      $region24: #{tpu_custom_call.1} parent=5 // pred_fallthru
        _
      %p221 = scmp.le.s32.totalorder 1, %s19
      %p222 = scmp.lt.s32.totalorder %s19, 5
      %p223 = pnand %p221, %p222
      %p224 = pneg %p223
      // Predicated region
      $region33: #{tpu_custom_call.1} parent=5 // pred_check
        _
      $region34: #{tpu_custom_call.1} parent=5 // pred_check_branch
        %226 = sbr.rel (%p223) target = $region36
      $region35: #{tpu_custom_call.1} parent=5 // pred_region
        %s227 = ssub.s32 %s19, 1
        %s228 = sand.u32 %s32, 1
        %s229 = scalar_lea.sflag [#allocation3], %s228
        %s230 = sand.u32 %s32, 1
        %s231 = smul.addr %s230, 32
        %s232 = scalar_lea.vmem [#allocation2], %s231
        // Predicated region
        $region37: #{tpu_custom_call.1} parent=35 // pred_check
          %p233 = pneg %p45
        $region38: #{tpu_custom_call.1} parent=35 // pred_check_branch
          %235 = sbr.rel (%p233) target = $region40
        $region39: #{tpu_custom_call.1} parent=35 // pred_region
          %237 = dma.done %s229, 512
        $region40: #{tpu_custom_call.1} parent=35 // pred_fallthru
          _
        %s238 = sand.u32 %s24, 1
        %s239 = scalar_lea.sflag [#allocation6], %s238
        %s240 = sand.u32 %s58, 1
        %s241 = smul.addr %s240, 32
        %s242 = scalar_lea.vmem [#allocation5], %s241
        // Predicated region
        $region41: #{tpu_custom_call.1} parent=35 // pred_check
          %p243 = pneg %p71
        $region42: #{tpu_custom_call.1} parent=35 // pred_check_branch
          %245 = sbr.rel (%p243) target = $region44
        $region43: #{tpu_custom_call.1} parent=35 // pred_region
          %247 = dma.done %s239, 512
        $region44: #{tpu_custom_call.1} parent=35 // pred_fallthru
          _
        // Predicated region
        $region45: #{tpu_custom_call.1} parent=35 // pred_check
          %p248 = pneg %p92
        $region46: #{tpu_custom_call.1} parent=35 // pred_check_branch
          %250 = sbr.rel (%p248) target = $region48
        $region47: #{tpu_custom_call.1} parent=35 // pred_region
          %252 = dma.done [#allocation6], 512
        $region48: #{tpu_custom_call.1} parent=35 // pred_fallthru
          _
        %s253 = sand.u32 %s32, 1
        %s254 = scalar_lea.sflag [#allocation3], %s253
        %s255 = sand.u32 %s32, 1
        %s256 = smul.addr %s255, 32
        %s257 = scalar_lea.vmem [#allocation2], %s256
        %p258 = pneg %p45
        %p259 = pneg %p42
        %s260 = sand.u32 %s24, 1
        %s261 = scalar_lea.sflag [#allocation6], %s260
        %s262 = sand.u32 %s58, 1
        %s263 = smul.addr %s262, 32
        %s264 = scalar_lea.vmem [#allocation5], %s263
        %p265 = pneg %p71
        %p266 = pneg %p68
        %p267 = pneg %p92
        %p268 = pneg %p89
        %p269 = pneg %p113
        %p270 = pneg %p110
        %p271 = pneg %p139
        %p272 = pneg %p136
        %s273 = sand.u32 %s126, 1
        %s274 = scalar_lea.sflag [#allocation4], %s273
        %s275 = sand.u32 %s126, 1
        %s276 = smul.addr %s275, 32
        %s277 = scalar_lea.vmem [#allocation8], %s276
        %s278 = smul.u32 2, %s24
        %s279 = smul.u32 2, %s24
        %s280 = smul.u32 2, %s24
        %v281 = vld [vmem:[%s232] sm:$0xff]
        %v282 = vld [vmem:[%s232 + $0x8] sm:$0xff]
        %v283 = vld [vmem:[%s232 + $0x10] sm:$0xff]
        %v284 = vld [vmem:[%s232 + $0x18] sm:$0xff]
        %v285 = vld [vmem:[%s242] sm:$0xff]
        %v286 = vld [vmem:[%s242 + $0x8] sm:$0xff]
        %v287 = vld [vmem:[%s242 + $0x10] sm:$0xff]
        %v288 = vld [vmem:[%s242 + $0x18] sm:$0xff]
        %vm289 = vcmask 130048
        %v291 = vsel %vm289, %v285, 0
        %v294 = vsel %vm289, %v286, 0
        %296 = vmatpush.msra.mxu0 0.0
        %297 = vmatpush.msra.mxu0 0.0
        %298 = vmatpush.msra.mxu0 0.0
        %299 = vmatpush.msra.mxu0 0.0
        %300 = vmatpush.msra.mxu0 0.0
        %301 = vmatpush.msra.mxu0 0.0
        %302 = vmatpush.msra.mxu0 0.0
        %303 = vmatpush.msra.mxu0 0.0
        %304 = vmatpush.msra.mxu0 0.0
        %305 = vmatpush.msra.mxu0 0.0
        %306 = vmatpush.msra.mxu0 0.0
        %307 = vmatpush.msra.mxu0 0.0
        %308 = vmatpush.msra.mxu0 0.0
        %309 = vmatpush.msra.mxu0 0.0
        %310 = vmatpush.msra.mxu0 %v282
        %311 = vmatpush.msra.mxu0 %v281
        %312 = vmatmul.f32.gmra.mxu0 %v291
        %v313 = vpop.f32.mrf.mxu0
        %v314 = vadd.f32 0.0, %v313
        %315 = vmatmul.f32.gmra.mxu0 %v294
        %v316 = vpop.f32.mrf.mxu0
        %v317 = vadd.f32 0.0, %v316
        %318 = vdwg.mxu0
        %v320 = vsel %vm289, %v287, 0
        %v323 = vsel %vm289, %v288, 0
        %325 = vmatpush.msra.mxu0 0.0
        %326 = vmatpush.msra.mxu0 0.0
        %327 = vmatpush.msra.mxu0 0.0
        %328 = vmatpush.msra.mxu0 0.0
        %329 = vmatpush.msra.mxu0 0.0
        %330 = vmatpush.msra.mxu0 0.0
        %331 = vmatpush.msra.mxu0 0.0
        %332 = vmatpush.msra.mxu0 0.0
        %333 = vmatpush.msra.mxu0 0.0
        %334 = vmatpush.msra.mxu0 0.0
        %335 = vmatpush.msra.mxu0 0.0
        %336 = vmatpush.msra.mxu0 0.0
        %337 = vmatpush.msra.mxu0 0.0
        %338 = vmatpush.msra.mxu0 0.0
        %339 = vmatpush.msra.mxu0 %v284
        %340 = vmatpush.msra.mxu0 %v283
        %341 = vmatmul.f32.gmra.mxu0 %v320
        %v342 = vpop.f32.mrf.mxu0
        %v343 = vadd.f32 0.0, %v342
        %344 = vmatmul.f32.gmra.mxu0 %v323
        %v345 = vpop.f32.mrf.mxu0
        %v346 = vadd.f32 0.0, %v345
        %347 = vdwg.mxu0
        %v348 = vsel %vm289, %v285, 0.0
        %349 = vadd.xlane.f32.xlu0 %v348
        %v350 = vpop.xlane.xlu0 %349
        %v351 = vsel %vm289, %v286, 0.0
        %352 = vadd.xlane.f32.xlu0 %v351
        %v353 = vpop.xlane.xlu0 %352
        %v354 = vsel %vm289, %v287, 0.0
        %355 = vadd.xlane.f32.xlu0 %v354
        %v356 = vpop.xlane.xlu0 %355
        %v357 = vsel %vm289, %v288, 0.0
        %358 = vadd.xlane.f32.xlu0 %v357
        %v359 = vpop.xlane.xlu0 %358
        %v360 = vld [vmem:[%s3] sm:$0x1]
        %v362 = vperm.slane %v360, 0
        %v364 = vmul.f32 %v350, %v362
        %v365 = vmul.f32 %v353, %v362
        %v366 = vmul.f32 %v356, %v362
        %v367 = vmul.f32 %v359, %v362
        %v368 = vld [vmem:[#allocation7] sm:$0xff]
        %v369 = vld [vmem:[#allocation7 + $0x8] sm:$0xff]
        %v370 = vld [vmem:[#allocation7 + $0x10] sm:$0xff]
        %v371 = vld [vmem:[#allocation7 + $0x18] sm:$0xff]
        %vm372 = vcmask 261120
        %v374 = vsel %vm372, %v314, 0
        %v377 = vsel %vm372, %v317, 0
        %v380 = vsel %vm372, %v343, 0
        %v383 = vsel %vm372, %v346, 0
        %385 = vmatpush.msra.mxu0 0.0
        %386 = vmatpush.msra.mxu0 0.0
        %387 = vmatpush.msra.mxu0 0.0
        %388 = vmatpush.msra.mxu0 0.0
        %389 = vmatpush.msra.mxu0 0.0
        %390 = vmatpush.msra.mxu0 0.0
        %391 = vmatpush.msra.mxu0 0.0
        %392 = vmatpush.msra.mxu0 0.0
        %393 = vmatpush.msra.mxu0 0.0
        %394 = vmatpush.msra.mxu0 0.0
        %395 = vmatpush.msra.mxu0 0.0
        %396 = vmatpush.msra.mxu0 0.0
        %397 = vmatpush.msra.mxu0 %v371
        %398 = vmatpush.msra.mxu0 %v370
        %399 = vmatpush.msra.mxu0 %v369
        %400 = vmatpush.msra.mxu0 %v368
        %401 = vmatmul.f32.gmra.mxu0 %v374
        %v402 = vpop.f32.mrf.mxu0
        %v403 = vadd.f32 0.0, %v402
        %404 = vmatmul.f32.gmra.mxu0 %v377
        %v405 = vpop.f32.mrf.mxu0
        %v406 = vadd.f32 0.0, %v405
        %407 = vmatmul.f32.gmra.mxu0 %v380
        %v408 = vpop.f32.mrf.mxu0
        %v409 = vadd.f32 0.0, %v408
        %410 = vmatmul.f32.gmra.mxu0 %v383
        %v411 = vpop.f32.mrf.mxu0
        %v412 = vadd.f32 0.0, %v411
        %413 = vdwg.mxu0
        %v414 = vadd.f32 %v403, %v364
        %v415 = vadd.f32 %v406, %v365
        %v416 = vadd.f32 %v409, %v366
        %v417 = vadd.f32 %v412, %v367
        %418 = vst.msk [vmem:[%s277] sm:$0xff] %vm372, %v414
        %419 = vst.msk [vmem:[%s277 + $0x8] sm:$0xff] %vm372, %v415
        %420 = vst.msk [vmem:[%s277 + $0x10] sm:$0xff] %vm372, %v416
        %421 = vst.msk [vmem:[%s277 + $0x18] sm:$0xff] %vm372, %v417
        %s422 = sand.u32 %s126, 1
        %s423 = scalar_lea.sflag [#allocation4], %s422
        %s424 = sand.u32 %s126, 1
        %s425 = smul.addr %s424, 32
        %s426 = scalar_lea.vmem [#allocation8], %s425
        // Predicated region
        $region49: #{tpu_custom_call.1} parent=35 // pred_check
          %p427 = pneg %p136
        $region50: #{tpu_custom_call.1} parent=35 // pred_check_branch
          %429 = sbr.rel (%p427) target = $region52
        $region51: #{tpu_custom_call.1} parent=35 // pred_region
          %s430 = smul.u32 2, %s24
          %432 = vsyncadd %s423, 0
          %s433 = smul.addr %s430, 2
          %s434 = smul.addr %s433, 8
          %s435 = scalar_lea.hbm %s4, %s434
          %s436 = sshll.u32 %s426, 4
          %s437 = int_to_ptr.vmem [resolvable:$true] %s436
          %s438 = sshll.u32 %s435, 4
          %s439 = int_to_ptr.hbm [resolvable:$true] %s438
          %444 = dma.vmem_to_hbm [thread:$0]  %s437, 512, %s439, %s423, 128, 128, 8
        $region52: #{tpu_custom_call.1} parent=35 // pred_fallthru
          _
      $region36: #{tpu_custom_call.1} parent=5 // pred_fallthru
        _
      %p445 = scmp.le.s32.totalorder 2, %s19
      // Predicated region
      $region53: #{tpu_custom_call.1} parent=5 // pred_check
        %p446 = pneg %p445
      $region54: #{tpu_custom_call.1} parent=5 // pred_check_branch
        %448 = sbr.rel (%p446) target = $region56
      $region55: #{tpu_custom_call.1} parent=5 // pred_region
        %s449 = ssub.s32 %s19, 2
        // Predicated region
        $region57: #{tpu_custom_call.1} parent=55 // pred_check
          %p450 = pneg %p142
        $region58: #{tpu_custom_call.1} parent=55 // pred_check_branch
          %452 = sbr.rel (%p450) target = $region60
        $region59: #{tpu_custom_call.1} parent=55 // pred_region
          %s453 = sand.u32 %s127, 1
          %s454 = scalar_lea.sflag [#allocation4], %s453
          %s455 = sand.u32 %s127, 1
          %s456 = smul.addr %s455, 32
          %s457 = scalar_lea.vmem [#allocation8], %s456
          %459 = dma.done %s454, 512
        $region60: #{tpu_custom_call.1} parent=55 // pred_fallthru
          _
      $region56: #{tpu_custom_call.1} parent=5 // pred_fallthru
        _
    $region6: #{tpu_custom_call.1} parent=1 // loop_footer
      %s23 = sadd.s32 1, %s19
    $region7: #{tpu_custom_call.1} parent=1 // loop_footer_branch
      %18 = sbr.rel target = $region3
    $region8: #{tpu_custom_call.1} parent=1 // loop_exit
      _
    %460 = vsyncpa [#allocation3], 1
    %s461 = scalar_lea.sflag [#allocation3], 1
    %462 = vsyncpa %s461, 1
    %463 = vsyncpa [#allocation6], 1
    %s464 = scalar_lea.sflag [#allocation6], 1
    %465 = vsyncpa %s464, 1
    %466 = vsyncpa [#allocation4], 1
    %s467 = scalar_lea.sflag [#allocation4], 1
    %468 = vsyncpa %s467, 1

</llo_original>
